<compile_context>
chip_gen: v6e
topology: v6e:2x2x1
jax: 0.10.0
libtpu: 0.0.40
codegen_flags: <defaults>
</compile_context>

<pallas_src>
import functools

import numpy as np
import jax
import jax.numpy as jnp
from jax.experimental import pallas as pl
from jax.experimental.pallas import tpu as pltpu


def _cdiv(a, b):
    return -(-a // b)


def _round_up(a, b):
    return _cdiv(a, b) * b


def _poly_tconv_kernel(z_ref, halo_ref, w_ref, o_ref, *, stride, Qt, offsets):
    """One (batch, time-tile) step of the grouped (groups=2) complex transposed conv.

    z_ref:    (1, 2, cih, Qt)            compact input tile (per group)
    halo_ref: (1, 1, 2, cih, S_pad)      next S columns of z (right halo of the tile)
    w_ref:    (2, stride, spl, Kmax*cih) pre-summed polyphase weights (im2col layout)
    o_ref:    (1, stride, 2, spl, Qt)    phase-major output tile
    """
    for g in range(2):                                    # groups=2 (real / imag halves)
        # (cih, Qt + S_pad) window; Qt is a multiple of 128 so the halo append is
        # lane-aligned and cheap.
        win = jnp.concatenate([z_ref[0, g], halo_ref[0, 0, g]], axis=-1)
        for p in range(stride):                           # static, stride is small
            # im2col: stack the tap-shifted views of this phase along the sublane
            # (channel) axis and contract them with ONE MXU matmul.
            cols = jnp.concatenate([win[:, off:off + Qt] for off in offsets[p]], axis=0)
            acc = jnp.dot(w_ref[g, p], cols, preferred_element_type=jnp.float32)
            o_ref[0, p, g] = acc.astype(o_ref.dtype)      # direct lane-dense store


def complex_transposed_conv1d(x, A, B, *, stride=1, padding=0, output_padding=0,
                              dilation=1, q_tile=512, input_dtype=None):
    """JAX/Pallas port of ComplexTransposedConv1d.forward.

    x: (N, C_in, T) float32   (C_in = C_in/2 real channels ++ C_in/2 imag channels)
    A, B: (C_in, C_out//2, K) float32  (transposed-conv weights, groups=2)
    returns: (N, C_out, T_out [+ 2*output_padding]) float32

    q_tile: output samples per phase per grid step (multiple of 128). 512 is safe on
            v5e/v7x; 2048-4096 is fine on v6e.
    input_dtype: e.g. jnp.bfloat16 on v6e/v7x for ~2x MXU rate and half the activation
            DMA (accumulation stays f32).
    """
    N, C_in, T = x.shape
    C_in_w, spl, K = A.shape
    assert C_in_w == C_in and B.shape == A.shape and C_in % 2 == 0
    cih = C_in // 2
    C_out = 2 * spl

    # weight_B = cat([B[:spl] * -1, B[spl:]]) along the in-channel axis.  NOTE: the
    # split index is out_channels//2 (spl), NOT C_in//2 -- this mirrors the PyTorch
    # module verbatim.
    sign = jnp.where(jnp.arange(C_in) < spl, -1.0, 1.0).astype(B.dtype)
    # real_part(x, A) + idea_part(x, B_signed) share the same input, so the two
    # transposed convs fuse into one with a pre-summed weight (halves the matmuls).
    Wsum = A + B * sign[:, None, None]                       # (C_in, spl, K)

    # ---- static polyphase structure (no zero-upsampled input) ----
    # out[q*stride + p] = sum_{k: (k*dil) % stride == p} W[:, :, k]^T @ x[:, q - (k*dil)//stride]
    taps = [[] for _ in range(stride)]
    for k in range(K):
        taps[(k * dilation) % stride].append(k)
    shift = [(k * dilation) // stride for k in range(K)]
    S = ((K - 1) * dilation) // stride            # max tap history needed (in x samples)
    Kmax = max(1, max(len(t) for t in taps))
    S_pad = max(S, 1)

    T_p = T + 2 * padding
    T_out = (T_p - 1) * stride + dilation * (K - 1) + 1
    q_needed = _cdiv(T_out, stride)               # outputs per phase
    Qt = min(_round_up(q_tile, 128), _round_up(q_needed, 128))
    J = _cdiv(q_needed, Qt)                       # time tiles
    L = J * Qt                                    # padded compact signal length (>= T_p + S)

    # Reflect pre-pad (module semantics), S left zeros (tap history) and right zeros up
    # to the tile grid, fused into ONE concatenate pass over x.
    x_g = x.reshape(N, 2, cih, T)                 # free reshape: group-major channels
    pieces = []
    if S > 0:
        pieces.append(jnp.zeros((N, 2, cih, S), x.dtype))
    if padding:
        pieces.append(x_g[..., 1:padding + 1][..., ::-1])
    pieces.append(x_g)
    if padding:
        pieces.append(x_g[..., T - 1 - padding:T - 1][..., ::-1])
    if L - T_p - S > 0:
        pieces.append(jnp.zeros((N, 2, cih, L - T_p - S), x.dtype))
    z = jnp.concatenate(pieces, axis=-1)          # (N, 2, cih, L)

    # Tiny per-tile right halo (the S columns just past each Qt block; zeros past the end).
    starts = (jnp.arange(J) + 1) * Qt
    hidx = starts[:, None] + jnp.arange(S_pad)[None, :]          # (J, S_pad)
    halo = jnp.take(z, jnp.minimum(hidx, L - 1), axis=-1)        # (N, 2, cih, J, S_pad)
    halo = jnp.where((hidx < L)[None, None, None], halo, 0)
    halo = jnp.transpose(halo, (0, 3, 1, 2, 4))                  # (N, J, 2, cih, S_pad)

    # Per-(group, phase) weights in im2col layout: W_poly[g, p] is (spl, Kmax*cih),
    # column block m <-> tap taps[p][m] (zero padded); fully contiguous in the kernel.
    Wg = Wsum.reshape(2, cih, spl, K)
    offsets = []
    rows = []
    for p in range(stride):
        offs = tuple(S - shift[k] for k in taps[p]) + (0,) * (Kmax - len(taps[p]))
        offsets.append(offs)
        per_g = []
        for g in range(2):
            blocks = [Wg[g, :, :, k].T for k in taps[p]]
            blocks += [jnp.zeros((spl, cih), Wsum.dtype)] * (Kmax - len(taps[p]))
            per_g.append(jnp.concatenate(blocks, axis=1))        # (spl, Kmax*cih)
        rows.append(jnp.stack(per_g))                            # (2, spl, Kmax*cih)
    W_poly = jnp.stack(rows, axis=1)                             # (2, stride, spl, Kmax*cih)
    offsets = tuple(offsets)

    if input_dtype is not None:       # bf16 on v6e/v7x; accumulation stays f32
        z = z.astype(input_dtype)
        halo = halo.astype(input_dtype)
        W_poly = W_poly.astype(input_dtype)

    kernel = functools.partial(_poly_tconv_kernel, stride=stride, Qt=Qt, offsets=offsets)

    ko = pl.pallas_call(
        kernel,
        out_shape=jax.ShapeDtypeStruct((N, stride, 2, spl, L), jnp.float32),
        grid=(N, J),
        in_specs=[
            pl.BlockSpec((1, 2, cih, Qt), lambda n, j: (n, 0, 0, j)),
            pl.BlockSpec((1, 1, 2, cih, S_pad), lambda n, j: (n, j, 0, 0, 0)),
            pl.BlockSpec((2, stride, spl, Kmax * cih), lambda n, j: (0, 0, 0, 0)),
        ],
        out_specs=pl.BlockSpec((1, stride, 2, spl, Qt), lambda n, j: (n, 0, 0, 0, j)),
        compiler_params=pltpu.CompilerParams(
            dimension_semantics=("parallel", "parallel"),
            # tiles are ~a few 100 KiB double-buffered; 32 MiB leaves ample headroom on
            # v5e/v6e/v7x while letting q_tile be raised.
            vmem_limit_bytes=32 * 1024 * 1024),
    )(z, halo, W_poly)

    # Interleave phases / merge groups back to NCT: (N, stride, 2, spl, L) -> (N, C_out, T_out)
    out = jnp.transpose(ko, (0, 2, 3, 4, 1)).reshape(N, C_out, L * stride)
    out = out[:, :, :T_out]

    # Module reflect-pads real/imag parts separately then sums; padding the sum is identical.
    if output_padding:
        out = jnp.pad(out, ((0, 0), (0, 0), (output_padding, output_padding)),
                      mode='reflect')
    return out


# ------------------------ pure-JAX reference (for checking) ------------------
def _ref_conv_transpose1d_grouped(x, w, stride, dilation, groups):
    N, C_in, T = x.shape
    _, Cog, K = w.shape
    C_out = Cog * groups
    T_out = (T - 1) * stride + dilation * (K - 1) + 1
    out = jnp.zeros((N, C_out, T_out), jnp.float32)
    cig = C_in // groups
    for g in range(groups):
        xg = x[:, g * cig:(g + 1) * cig]
        wg = w[g * cig:(g + 1) * cig]
        for s in range(T):
            for k in range(K):
                t = s * stride + k * dilation
                out = out.at[:, g * Cog:(g + 1) * Cog, t].add(
                    jnp.einsum('ni,io->no', xg[:, :, s], wg[:, :, k]))
    return out


def _ref_forward(x, A, B, stride, padding, output_padding, dilation):
    C_in = x.shape[1]
    spl = A.shape[1]
    if padding:
        x = jnp.pad(x, ((0, 0), (0, 0), (padding, padding)), mode='reflect')
    sign = jnp.where(jnp.arange(C_in) < spl, -1.0, 1.0).astype(B.dtype)
    weight_B = B * sign[:, None, None]
    real = _ref_conv_transpose1d_grouped(x, A, stride, dilation, groups=2)
    imag = _ref_conv_transpose1d_grouped(x, weight_B, stride, dilation, groups=2)
    if output_padding:
        real = jnp.pad(real, ((0, 0), (0, 0), (output_padding,) * 2), mode='reflect')
        imag = jnp.pad(imag, ((0, 0), (0, 0), (output_padding,) * 2), mode='reflect')
    return real + imag


if __name__ == "__main__":
    configs = [
        # (N, C_in, C_out, K, T, stride, padding, output_padding, dilation)
        (2, 6, 4, 3, 16, 2, 1, 1, 1),   # stride>1, C_in != C_out
        (1, 4, 8, 3, 16, 1, 0, 0, 1),   # stride=1 path
        (2, 4, 4, 4, 12, 3, 2, 0, 2),   # uneven taps per phase (gcd(stride, dil) > 1)
    ]

    key = jax.random.PRNGKey(0)
    for cfg in configs:
        N, C_in, C_out, K, T, stride, padding, output_padding, dilation = cfg
        spl = C_out // 2
        key, kA, kB, kx = jax.random.split(key, 4)

        # Deterministic init mirroring _ComplexConvNd.reset_parameters.
        fan_in = spl * K
        std = float(np.sqrt(2.0)) / np.sqrt(fan_in)
        bound = float(np.sqrt(3.0) * std)
        A = jax.random.uniform(kA, (C_in, spl, K), jnp.float32,
                               minval=-bound / np.pi ** 2, maxval=bound / np.pi ** 2)
        B = jax.random.uniform(kB, (C_in, spl, K), jnp.float32,
                               minval=-1.0 / np.pi, maxval=1.0 / np.pi)
        x = jax.random.normal(kx, (N, C_in, T), jnp.float32)

        out = jax.block_until_ready(complex_transposed_conv1d(
            x, A, B, stride=stride, padding=padding,
            output_padding=output_padding, dilation=dilation))
        ref = jax.block_until_ready(_ref_forward(
            x, A, B, stride, padding, output_padding, dilation))

        np.testing.assert_allclose(np.asarray(out), np.asarray(ref),
                                   rtol=1e-4, atol=1e-5)

    print("KERNEL_OK")
</pallas_src>

<mosaic_0001>
module attributes {stable_mosaic.version = 11 : i64} {
  func.func @_poly_tconv_kernel(%arg0: i32, %arg1: i32, %arg2: memref<1x2x3x128xf32, #tpu.memory_space<vmem>>, %arg3: memref<1x1x2x3x1xf32, #tpu.memory_space<vmem>>, %arg4: memref<2x2x2x6xf32, #tpu.memory_space<vmem>>, %arg5: memref<1x2x2x2x128xf32, #tpu.memory_space<vmem>>) attributes {dimension_semantics = [#tpu.dimension_semantics<parallel>, #tpu.dimension_semantics<parallel>], iteration_bounds = array<i64: 2, 1>, scalar_prefetch = 0 : i64, scratch_operands = 0 : i64, tpu.core_type = #tpu.core_type<tc>, window_params = [{transform_indices = @transform_0, window_bounds = array<i64: 1, 2, 3, 128>}, {transform_indices = @transform_1, window_bounds = array<i64: 1, 1, 2, 3, 1>}, {pipeline_mode = #tpu.pipeline_mode<synchronous>, transform_indices = @transform_2, window_bounds = array<i64: 2, 2, 2, 6>}, {transform_indices = @transform_3, window_bounds = array<i64: 1, 2, 2, 2, 128>}]} {
    %c0 = arith.constant 0 : index
    %c0_0 = arith.constant 0 : index
    %c0_1 = arith.constant 0 : index
    %c0_2 = arith.constant 0 : index
    %0 = vector.load %arg2[%c0, %c0_0, %c0_1, %c0_2] : memref<1x2x3x128xf32, #tpu.memory_space<vmem>>, vector<1x1x3x128xf32>
    %1 = vector.shape_cast %0 : vector<1x1x3x128xf32> to vector<3x128xf32>
    %c0_3 = arith.constant 0 : index
    %c0_4 = arith.constant 0 : index
    %c0_5 = arith.constant 0 : index
    %c0_6 = arith.constant 0 : index
    %c0_7 = arith.constant 0 : index
    %2 = vector.load %arg3[%c0_3, %c0_4, %c0_5, %c0_6, %c0_7] : memref<1x1x2x3x1xf32, #tpu.memory_space<vmem>>, vector<1x1x1x3x1xf32>
    %3 = vector.shape_cast %2 : vector<1x1x1x3x1xf32> to vector<3x1xf32>
    %4 = tpu.concatenate %1, %3 in 1 : vector<3x128xf32>, vector<3x1xf32> -> vector<3x129xf32>
    %5 = vector.extract_strided_slice %4 {offsets = [0, 1], sizes = [3, 128], strides = [1, 1]} : vector<3x129xf32> to vector<3x128xf32>
    %6 = vector.extract_strided_slice %4 {offsets = [0, 0], sizes = [3, 128], strides = [1, 1]} : vector<3x129xf32> to vector<3x128xf32>
    %7 = tpu.concatenate %5, %6 in 0 : vector<3x128xf32>, vector<3x128xf32> -> vector<6x128xf32>
    %c0_8 = arith.constant 0 : index
    %c0_9 = arith.constant 0 : index
    %c0_10 = arith.constant 0 : index
    %c0_11 = arith.constant 0 : index
    %8 = vector.load %arg4[%c0_8, %c0_9, %c0_10, %c0_11] : memref<2x2x2x6xf32, #tpu.memory_space<vmem>>, vector<1x1x2x6xf32>
    %9 = vector.shape_cast %8 : vector<1x1x2x6xf32> to vector<2x6xf32>
    %cst = arith.constant dense<0.000000e+00> : vector<2x128xf32>
    %10 = tpu.matmul %9, %7, %cst {dimension_numbers = #tpu.dot_dimension_numbers<[1], [0], [0], [1], [0, 0, 1, 1], [], []>} : vector<2x6xf32>, vector<6x128xf32>, vector<2x128xf32> -> vector<2x128xf32>
    %c0_12 = arith.constant 0 : index
    %c0_13 = arith.constant 0 : index
    %c0_14 = arith.constant 0 : index
    %c0_15 = arith.constant 0 : index
    %c0_16 = arith.constant 0 : index
    %11 = vector.load %arg5[%c0_12, %c0_13, %c0_14, %c0_15, %c0_16] : memref<1x2x2x2x128xf32, #tpu.memory_space<vmem>>, vector<1x1x1x2x128xf32>
    %12 = vector.shape_cast %11 : vector<1x1x1x2x128xf32> to vector<2x128xf32>
    %13 = vector.shape_cast %10 : vector<2x128xf32> to vector<1x1x1x2x128xf32>
    tpu.vector_store %arg5[%c0_12, %c0_13, %c0_14, %c0_15, %c0_16], %13 {strides = array<i32>} : memref<1x2x2x2x128xf32, #tpu.memory_space<vmem>>, vector<1x1x1x2x128xf32>,
    %14 = vector.extract_strided_slice %4 {offsets = [0, 1], sizes = [3, 128], strides = [1, 1]} : vector<3x129xf32> to vector<3x128xf32>
    %15 = vector.extract_strided_slice %4 {offsets = [0, 0], sizes = [3, 128], strides = [1, 1]} : vector<3x129xf32> to vector<3x128xf32>
    %16 = tpu.concatenate %14, %15 in 0 : vector<3x128xf32>, vector<3x128xf32> -> vector<6x128xf32>
    %c0_17 = arith.constant 0 : index
    %c1 = arith.constant 1 : index
    %c0_18 = arith.constant 0 : index
    %c0_19 = arith.constant 0 : index
    %17 = vector.load %arg4[%c0_17, %c1, %c0_18, %c0_19] : memref<2x2x2x6xf32, #tpu.memory_space<vmem>>, vector<1x1x2x6xf32>
    %18 = vector.shape_cast %17 : vector<1x1x2x6xf32> to vector<2x6xf32>
    %cst_20 = arith.constant dense<0.000000e+00> : vector<2x128xf32>
    %19 = tpu.matmul %18, %16, %cst_20 {dimension_numbers = #tpu.dot_dimension_numbers<[1], [0], [0], [1], [0, 0, 1, 1], [], []>} : vector<2x6xf32>, vector<6x128xf32>, vector<2x128xf32> -> vector<2x128xf32>
    %c0_21 = arith.constant 0 : index
    %c1_22 = arith.constant 1 : index
    %c0_23 = arith.constant 0 : index
    %c0_24 = arith.constant 0 : index
    %c0_25 = arith.constant 0 : index
    %20 = vector.load %arg5[%c0_21, %c1_22, %c0_23, %c0_24, %c0_25] : memref<1x2x2x2x128xf32, #tpu.memory_space<vmem>>, vector<1x1x1x2x128xf32>
    %21 = vector.shape_cast %20 : vector<1x1x1x2x128xf32> to vector<2x128xf32>
    %22 = vector.shape_cast %19 : vector<2x128xf32> to vector<1x1x1x2x128xf32>
    tpu.vector_store %arg5[%c0_21, %c1_22, %c0_23, %c0_24, %c0_25], %22 {strides = array<i32>} : memref<1x2x2x2x128xf32, #tpu.memory_space<vmem>>, vector<1x1x1x2x128xf32>,
    %c0_26 = arith.constant 0 : index
    %c1_27 = arith.constant 1 : index
    %c0_28 = arith.constant 0 : index
    %c0_29 = arith.constant 0 : index
    %23 = vector.load %arg2[%c0_26, %c1_27, %c0_28, %c0_29] : memref<1x2x3x128xf32, #tpu.memory_space<vmem>>, vector<1x1x3x128xf32>
    %24 = vector.shape_cast %23 : vector<1x1x3x128xf32> to vector<3x128xf32>
    %c0_30 = arith.constant 0 : index
    %c0_31 = arith.constant 0 : index
    %c1_32 = arith.constant 1 : index
    %c0_33 = arith.constant 0 : index
    %c0_34 = arith.constant 0 : index
    %25 = vector.load %arg3[%c0_30, %c0_31, %c1_32, %c0_33, %c0_34] : memref<1x1x2x3x1xf32, #tpu.memory_space<vmem>>, vector<1x1x1x3x1xf32>
    %26 = vector.shape_cast %25 : vector<1x1x1x3x1xf32> to vector<3x1xf32>
    %27 = tpu.concatenate %24, %26 in 1 : vector<3x128xf32>, vector<3x1xf32> -> vector<3x129xf32>
    %28 = vector.extract_strided_slice %27 {offsets = [0, 1], sizes = [3, 128], strides = [1, 1]} : vector<3x129xf32> to vector<3x128xf32>
    %29 = vector.extract_strided_slice %27 {offsets = [0, 0], sizes = [3, 128], strides = [1, 1]} : vector<3x129xf32> to vector<3x128xf32>
    %30 = tpu.concatenate %28, %29 in 0 : vector<3x128xf32>, vector<3x128xf32> -> vector<6x128xf32>
    %c1_35 = arith.constant 1 : index
    %c0_36 = arith.constant 0 : index
    %c0_37 = arith.constant 0 : index
    %c0_38 = arith.constant 0 : index
    %31 = vector.load %arg4[%c1_35, %c0_36, %c0_37, %c0_38] : memref<2x2x2x6xf32, #tpu.memory_space<vmem>>, vector<1x1x2x6xf32>
    %32 = vector.shape_cast %31 : vector<1x1x2x6xf32> to vector<2x6xf32>
    %cst_39 = arith.constant dense<0.000000e+00> : vector<2x128xf32>
    %33 = tpu.matmul %32, %30, %cst_39 {dimension_numbers = #tpu.dot_dimension_numbers<[1], [0], [0], [1], [0, 0, 1, 1], [], []>} : vector<2x6xf32>, vector<6x128xf32>, vector<2x128xf32> -> vector<2x128xf32>
    %c0_40 = arith.constant 0 : index
    %c0_41 = arith.constant 0 : index
    %c1_42 = arith.constant 1 : index
    %c0_43 = arith.constant 0 : index
    %c0_44 = arith.constant 0 : index
    %34 = vector.load %arg5[%c0_40, %c0_41, %c1_42, %c0_43, %c0_44] : memref<1x2x2x2x128xf32, #tpu.memory_space<vmem>>, vector<1x1x1x2x128xf32>
    %35 = vector.shape_cast %34 : vector<1x1x1x2x128xf32> to vector<2x128xf32>
    %36 = vector.shape_cast %33 : vector<2x128xf32> to vector<1x1x1x2x128xf32>
    tpu.vector_store %arg5[%c0_40, %c0_41, %c1_42, %c0_43, %c0_44], %36 {strides = array<i32>} : memref<1x2x2x2x128xf32, #tpu.memory_space<vmem>>, vector<1x1x1x2x128xf32>,
    %37 = vector.extract_strided_slice %27 {offsets = [0, 1], sizes = [3, 128], strides = [1, 1]} : vector<3x129xf32> to vector<3x128xf32>
    %38 = vector.extract_strided_slice %27 {offsets = [0, 0], sizes = [3, 128], strides = [1, 1]} : vector<3x129xf32> to vector<3x128xf32>
    %39 = tpu.concatenate %37, %38 in 0 : vector<3x128xf32>, vector<3x128xf32> -> vector<6x128xf32>
    %c1_45 = arith.constant 1 : index
    %c1_46 = arith.constant 1 : index
    %c0_47 = arith.constant 0 : index
    %c0_48 = arith.constant 0 : index
    %40 = vector.load %arg4[%c1_45, %c1_46, %c0_47, %c0_48] : memref<2x2x2x6xf32, #tpu.memory_space<vmem>>, vector<1x1x2x6xf32>
    %41 = vector.shape_cast %40 : vector<1x1x2x6xf32> to vector<2x6xf32>
    %cst_49 = arith.constant dense<0.000000e+00> : vector<2x128xf32>
    %42 = tpu.matmul %41, %39, %cst_49 {dimension_numbers = #tpu.dot_dimension_numbers<[1], [0], [0], [1], [0, 0, 1, 1], [], []>} : vector<2x6xf32>, vector<6x128xf32>, vector<2x128xf32> -> vector<2x128xf32>
    %c0_50 = arith.constant 0 : index
    %c1_51 = arith.constant 1 : index
    %c1_52 = arith.constant 1 : index
    %c0_53 = arith.constant 0 : index
    %c0_54 = arith.constant 0 : index
    %43 = vector.load %arg5[%c0_50, %c1_51, %c1_52, %c0_53, %c0_54] : memref<1x2x2x2x128xf32, #tpu.memory_space<vmem>>, vector<1x1x1x2x128xf32>
    %44 = vector.shape_cast %43 : vector<1x1x1x2x128xf32> to vector<2x128xf32>
    %45 = vector.shape_cast %42 : vector<2x128xf32> to vector<1x1x1x2x128xf32>
    tpu.vector_store %arg5[%c0_50, %c1_51, %c1_52, %c0_53, %c0_54], %45 {strides = array<i32>} : memref<1x2x2x2x128xf32, #tpu.memory_space<vmem>>, vector<1x1x1x2x128xf32>,
    return
  }
  func.func @transform_0(%arg0: i32, %arg1: i32) -> (i32, i32, i32, i32) {
    %c0_i32 = arith.constant 0 : i32
    %c0_i32_0 = arith.constant 0 : i32
    %c0_i32_1 = arith.constant 0 : i32
    return %arg0, %c0_i32, %c0_i32_0, %arg1 : i32, i32, i32, i32
  }
  func.func @transform_1(%arg0: i32, %arg1: i32) -> (i32, i32, i32, i32, i32) {
    %c0_i32 = arith.constant 0 : i32
    %c0_i32_0 = arith.constant 0 : i32
    %c0_i32_1 = arith.constant 0 : i32
    %c0_i32_2 = arith.constant 0 : i32
    return %arg0, %arg1, %c0_i32, %c0_i32_0, %c0_i32_1 : i32, i32, i32, i32, i32
  }
  func.func @transform_2(%arg0: i32, %arg1: i32) -> (i32, i32, i32, i32) {
    %c0_i32 = arith.constant 0 : i32
    %c0_i32_0 = arith.constant 0 : i32
    %c0_i32_1 = arith.constant 0 : i32
    %c0_i32_2 = arith.constant 0 : i32
    %c0_i32_3 = arith.constant 0 : i32
    return %c0_i32, %c0_i32_0, %c0_i32_1, %c0_i32_2 : i32, i32, i32, i32
  }
  func.func @transform_3(%arg0: i32, %arg1: i32) -> (i32, i32, i32, i32, i32) {
    %c0_i32 = arith.constant 0 : i32
    %c0_i32_0 = arith.constant 0 : i32
    %c0_i32_1 = arith.constant 0 : i32
    %c0_i32_2 = arith.constant 0 : i32
    return %arg0, %c0_i32, %c0_i32_0, %c0_i32_1, %arg1 : i32, i32, i32, i32, i32
  }
}

</mosaic_0001>

<llo_original>
// kernel: tpu_custom_call.1
$region0: #{tpu_custom_call.1}
  #allocation0 [shape = 'u32[]', space=smem, size = 0x4, offset = 0x4, fixed_abs, tag = 'smem constant byte address 0x4 - core index']
  #allocation1 [shape = 'u32[144,128]{1,0:T(1,128)}', space=vmem, size = 0x12000, scoped, tag = 'internal scratch']
  %s0 = inlined_call_operand.vmem [shape: f32[2,2,3,128], index: 0, kind: input, shape index: {}]
  %s1 = inlined_call_operand.vmem [shape: f32[2,1,2,3,1], index: 1, kind: input, shape index: {}]
  %s2 = inlined_call_operand.vmem [shape: f32[2,2,2,6], index: 2, kind: input, shape index: {}]
  %s3 = inlined_call_operand.hbm [shape: f32[2,2,2,2,128], index: 3, kind: output, shape index: {}]
  %s4 = sld [smem:[#allocation0]]
  $region45: #{tpu_custom_call.1} parent=0
    _
  %s6 = ssub.s32 1, %s4
  %s7 = scalar_select 0, %s6, %s4
  $region1: #{tpu_custom_call.1} parent=0
    #allocation2 [shape = 'u8[8192]{0}', space=vmem, size = 0x2000, scoped, tag = 'output window, operand 0']
    #allocation3 [shape = 's32[2]{0}', space=sflag, size = 0x8, scoped, tag = 'scoped memory for tpu_custom_call.1']
    %8 = vsyncpa [#allocation3], 0
    %s9 = scalar_lea.sflag [#allocation3], 1
    %10 = vsyncpa %s9, 0
    loop: start=0, step=1, limit=4
    $region2: #{tpu_custom_call.1} parent=1 // loop_pre_header
      _
    $region3: #{tpu_custom_call.1} parent=1 // loop_header
      %s12 = sphi 0, %s16
      %p13 = scmp.ge.s32.totalorder %s12, 4
      %s19 = sphi 0, %s31
      %s20 = sphi 0, %s27
      %s21 = sphi 0, %s19
      %s22 = sphi 0, %s20
      %s23 = sphi 0, %s21
      %s24 = sphi 0, %s22
      %s36 = sphi 0, %s38
      %s39 = sphi 0, %s36
      %s40 = sphi 0, %s39
      %s56 = sphi 0, %s40
      %s64 = sphi 0, %s66
      %s67 = sphi 0, %s64
      %s68 = sphi 0, %s67
      %s84 = sphi 0, %s68
      %s88 = sphi 0, %s88
      %s90 = sphi 0, %s88
      %s91 = sphi 0, %s90
      %s105 = sphi 0, %s91
      %s113 = sphi 0, %s115
      %s116 = sphi 0, %s113
      %s117 = sphi 0, %s116
      %s133 = sphi 0, %s117
    $region4: #{tpu_custom_call.1} parent=1 // loop_header_branch
      %15 = sbr.rel (%p13) target = $region8
    $region5: #{tpu_custom_call.1} parent=1 // loop_body
      %s17 = ssub.s32 %s12, 1
      %s18 = ssub.s32 %s12, 2
      %s25 = sadd.s32 1, %s20
      %p26 = scmp.ge.s32.totalorder %s25, 1
      %s27 = scalar_select %p26, 0, %s25
      %s28 = sadd.s32 1, %s19
      %s29 = scalar_select %p26, %s28, %s19
      %p30 = scmp.ge.s32.totalorder %s29, 2
      %s31 = scalar_select %p30, 0, %s29
      %s32 = ssub.s32 %s19, %s31
      %s33 = ssub.s32 %s20, %s27
      %s34 = sor.u32 %s32, %s33
      %p35 = scmp.eq.s32.totalorder %s34, 0
      %s37 = sadd.s32 %s36, 1
      %s38 = scalar_select %p35, %s36, %s37
      %p41 = pneg %p35
      %p42 = scmp.eq.s32.totalorder %s12, 1
      %p43 = por %p41, %p42
      %p44 = scmp.ne.s32.totalorder %s36, %s39
      %p45 = scmp.eq.s32.totalorder %s12, 0
      %p46 = por %p44, %p45
      %p47 = scmp.ne.s32.totalorder %s36, %s39
      %p48 = scmp.eq.s32.totalorder %s17, 1
      %p49 = por %p47, %p48
      %p50 = scmp.ne.s32.totalorder %s39, %s40
      %p51 = scmp.eq.s32.totalorder %s17, 0
      %p52 = por %p50, %p51
      %p53 = scmp.ne.s32.totalorder %s39, %s40
      %p54 = scmp.eq.s32.totalorder %s18, 1
      %p55 = por %p53, %p54
      %p57 = scmp.ne.s32.totalorder %s40, %s56
      %p58 = scmp.eq.s32.totalorder %s18, 0
      %p59 = por %p57, %p58
      %s60 = ssub.s32 %s19, %s31
      %s61 = ssub.s32 %s20, %s27
      %s62 = sor.u32 %s60, %s61
      %p63 = scmp.eq.s32.totalorder %s62, 0
      %s65 = sadd.s32 %s64, 1
      %s66 = scalar_select %p63, %s64, %s65
      %p69 = pneg %p63
      %p70 = scmp.eq.s32.totalorder %s12, 1
      %p71 = por %p69, %p70
      %p72 = scmp.ne.s32.totalorder %s64, %s67
      %p73 = scmp.eq.s32.totalorder %s12, 0
      %p74 = por %p72, %p73
      %p75 = scmp.ne.s32.totalorder %s64, %s67
      %p76 = scmp.eq.s32.totalorder %s17, 1
      %p77 = por %p75, %p76
      %p78 = scmp.ne.s32.totalorder %s67, %s68
      %p79 = scmp.eq.s32.totalorder %s17, 0
      %p80 = por %p78, %p79
      %p81 = scmp.ne.s32.totalorder %s67, %s68
      %p82 = scmp.eq.s32.totalorder %s18, 1
      %p83 = por %p81, %p82
      %p85 = scmp.ne.s32.totalorder %s68, %s84
      %p86 = scmp.eq.s32.totalorder %s18, 0
      %p87 = por %p85, %p86
      %s89 = sadd.s32 %s88, 1
      %p92 = scmp.eq.s32.totalorder %s12, 1
      %p93 = scmp.ne.s32.totalorder %s88, %s90
      %p94 = scmp.eq.s32.totalorder %s12, 0
      %p95 = por %p93, %p94
      %p96 = scmp.ne.s32.totalorder %s88, %s90
      %p97 = scmp.eq.s32.totalorder %s17, 1
      %p98 = por %p96, %p97
      %p99 = scmp.ne.s32.totalorder %s90, %s91
      %p100 = scmp.eq.s32.totalorder %s17, 0
      %p101 = por %p99, %p100
      %p102 = scmp.ne.s32.totalorder %s90, %s91
      %p103 = scmp.eq.s32.totalorder %s18, 1
      %p104 = por %p102, %p103
      %p106 = scmp.ne.s32.totalorder %s91, %s105
      %p107 = scmp.eq.s32.totalorder %s18, 0
      %p108 = por %p106, %p107
      %s109 = ssub.s32 %s19, %s31
      %s110 = ssub.s32 %s20, %s27
      %s111 = sor.u32 %s109, %s110
      %p112 = scmp.eq.s32.totalorder %s111, 0
      %s114 = sadd.s32 %s113, 1
      %s115 = scalar_select %p112, %s113, %s114
      %p118 = pneg %p112
      %p119 = scmp.eq.s32.totalorder %s12, 1
      %p120 = por %p118, %p119
      %p121 = scmp.ne.s32.totalorder %s113, %s116
      %p122 = scmp.eq.s32.totalorder %s12, 0
      %p123 = por %p121, %p122
      %p124 = scmp.ne.s32.totalorder %s113, %s116
      %p125 = scmp.eq.s32.totalorder %s17, 1
      %p126 = por %p124, %p125
      %p127 = scmp.ne.s32.totalorder %s116, %s117
      %p128 = scmp.eq.s32.totalorder %s17, 0
      %p129 = por %p127, %p128
      %p130 = scmp.ne.s32.totalorder %s116, %s117
      %p131 = scmp.eq.s32.totalorder %s18, 1
      %p132 = por %p130, %p131
      %p134 = scmp.ne.s32.totalorder %s117, %s133
      %p135 = scmp.eq.s32.totalorder %s18, 0
      %p136 = por %p134, %p135
      %p137 = scmp.le.s32.totalorder 1, %s12
      %p138 = scmp.lt.s32.totalorder %s12, 3
      %p139 = pnand %p137, %p138
      %p140 = pneg %p139
      // Predicated region
      $region9: #{tpu_custom_call.1} parent=5 // pred_check
        _
      $region10: #{tpu_custom_call.1} parent=5 // pred_check_branch
        %142 = sbr.rel (%p139) target = $region12
      $region11: #{tpu_custom_call.1} parent=5 // pred_region
        %s143 = ssub.s32 %s12, 1
        // Predicated region
        $region13: #{tpu_custom_call.1} parent=11 // pred_check
          %p144 = pneg %p101
        $region14: #{tpu_custom_call.1} parent=11 // pred_check_branch
          %146 = sbr.rel (%p144) target = $region16
        $region15: #{tpu_custom_call.1} parent=11 // pred_region
          _
        $region16: #{tpu_custom_call.1} parent=11 // pred_fallthru
          _
      $region12: #{tpu_custom_call.1} parent=5 // pred_fallthru
        _
      %p147 = scmp.lt.s32.totalorder %s12, 2
      // Predicated region
      $region17: #{tpu_custom_call.1} parent=5 // pred_check
        %p148 = pneg %p147
      $region18: #{tpu_custom_call.1} parent=5 // pred_check_branch
        %150 = sbr.rel (%p148) target = $region20
      $region19: #{tpu_custom_call.1} parent=5 // pred_region
        // Predicated region
        $region21: #{tpu_custom_call.1} parent=19 // pred_check
          %p151 = pneg %p46
        $region22: #{tpu_custom_call.1} parent=19 // pred_check_branch
          %153 = sbr.rel (%p151) target = $region24
        $region23: #{tpu_custom_call.1} parent=19 // pred_region
          %p154 = scmp.lt.s32.totalorder %s19, 1
          %s155 = scalar_select %p154, %s19, 1
          %p156 = scmp.lt.s32.totalorder %s20, 0
          %s157 = scalar_select %p156, %s20, 0
          %s158 = smul.addr %s155, 2
          %s159 = sadd.s32 %s157, %s158
          %s160 = smul.addr %s159, 4
          %s161 = scalar_lea.vmem %s0, %s160
        $region24: #{tpu_custom_call.1} parent=19 // pred_fallthru
          _
        // Predicated region
        $region25: #{tpu_custom_call.1} parent=19 // pred_check
          %p162 = pneg %p74
        $region26: #{tpu_custom_call.1} parent=19 // pred_check_branch
          %164 = sbr.rel (%p162) target = $region28
        $region27: #{tpu_custom_call.1} parent=19 // pred_region
          %p165 = scmp.lt.s32.totalorder %s19, 1
          %s166 = scalar_select %p165, %s19, 1
          %p167 = scmp.lt.s32.totalorder %s20, 0
          %s168 = scalar_select %p167, %s20, 0
          %s169 = smul.addr %s168, 2
          %s170 = smul.addr %s166, 2
          %s171 = sadd.s32 %s169, %s170
          %s172 = smul.addr %s171, 4
          %s173 = scalar_lea.vmem %s1, %s172
        $region28: #{tpu_custom_call.1} parent=19 // pred_fallthru
          _
      $region20: #{tpu_custom_call.1} parent=5 // pred_fallthru
        _
      %p174 = scmp.le.s32.totalorder 1, %s12
      %p175 = scmp.lt.s32.totalorder %s12, 3
      %p176 = pnand %p174, %p175
      %p177 = pneg %p176
      // Predicated region
      $region29: #{tpu_custom_call.1} parent=5 // pred_check
        _
      $region30: #{tpu_custom_call.1} parent=5 // pred_check_branch
        %179 = sbr.rel (%p176) target = $region32
      $region31: #{tpu_custom_call.1} parent=5 // pred_region
        %s180 = ssub.s32 %s12, 1
        %p181 = scmp.lt.s32.totalorder %s21, 1
        %s182 = scalar_select %p181, %s21, 1
        %p183 = scmp.lt.s32.totalorder %s22, 0
        %s184 = scalar_select %p183, %s22, 0
        %s185 = smul.addr %s182, 2
        %s186 = sadd.s32 %s184, %s185
        %s187 = smul.addr %s186, 4
        %s188 = scalar_lea.vmem %s0, %s187
        %p189 = pneg %p52
        %p190 = pneg %p49
        %p191 = scmp.lt.s32.totalorder %s21, 1
        %s192 = scalar_select %p191, %s21, 1
        %p193 = scmp.lt.s32.totalorder %s22, 0
        %s194 = scalar_select %p193, %s22, 0
        %s195 = smul.addr %s194, 2
        %s196 = smul.addr %s192, 2
        %s197 = sadd.s32 %s195, %s196
        %s198 = smul.addr %s197, 4
        %s199 = scalar_lea.vmem %s1, %s198
        %p200 = pneg %p80
        %p201 = pneg %p77
        %p202 = pneg %p101
        %p203 = pneg %p98
        %p204 = pneg %p129
        %p205 = pneg %p126
        %s206 = sand.u32 %s116, 1
        %s207 = scalar_lea.sflag [#allocation3], %s206
        %s208 = sand.u32 %s116, 1
        %s209 = smul.addr %s208, 8
        %s210 = scalar_lea.vmem [#allocation2], %s209
        %p211 = scmp.lt.s32.totalorder %s21, 1
        %s212 = scalar_select %p211, %s21, 1
        %p213 = scmp.lt.s32.totalorder %s22, 0
        %s214 = scalar_select %p213, %s22, 0
        %s215 = smul.addr %s212, 2
        %s216 = sadd.s32 %s214, %s215
        %s217 = smul.addr %s216, 4
        %s218 = scalar_lea.vmem %s0, %s217
        %p219 = scmp.lt.s32.totalorder %s21, 1
        %s220 = scalar_select %p219, %s21, 1
        %p221 = scmp.lt.s32.totalorder %s22, 0
        %s222 = scalar_select %p221, %s22, 0
        %s223 = smul.addr %s222, 2
        %s224 = smul.addr %s220, 2
        %s225 = sadd.s32 %s223, %s224
        %s226 = smul.addr %s225, 4
        %s227 = scalar_lea.vmem %s1, %s226
        %v228 = vld [vmem:[%s218] sm:$0x7]
        %v229 = vld [vmem:[%s227] sm:$0x7]
        %v231 = vrot.slane %v228, 5
        %232 = vrot.lane.b32.xlu0 %v231, 1
        %v233 = vpop.permute.xlu0 %232
        %vm235 = vcmask 1042432
        %v236 = vsel %vm235, %v228, %v233
        %v237 = vsel %vm235, %v229, %v233
        %v238 = vld [vmem:[%s2] sm:$0x3]
        %241 = vrot.lane.b32.xlu0 %v236, 127
        %v242 = vpop.permute.xlu0 %241
        %243 = vrot.lane.b32.xlu0 %v237, 127
        %v244 = vpop.permute.xlu0 %243
        %vm245 = vcmask 1039360
        %v246 = vsel %vm245, %v242, %v244
        %vm247 = vcmask 48128
        %v249 = vsel %vm247, %v238, 0
        %vm251 = vcmask 1045504
        %v252 = vsel %vm251, %v246, 0
        %254 = vmatprep.subr.mxu0 0.0
        %255 = vmatpush1.msra.mxu0 0.0
        %256 = vmatprep.subr.mxu0 0.0
        %257 = vmatpush1.msra.mxu0 0.0
        %258 = vmatprep.subr.mxu0 0.0
        %259 = vmatpush1.msra.mxu0 0.0
        %260 = vmatprep.subr.mxu0 0.0
        %261 = vmatpush1.msra.mxu0 0.0
        %262 = vmatprep.subr.mxu0 0.0
        %263 = vmatpush1.msra.mxu0 0.0
        %264 = vmatprep.subr.mxu0 0.0
        %265 = vmatpush1.msra.mxu0 0.0
        %266 = vmatprep.subr.mxu0 0.0
        %267 = vmatpush1.msra.mxu0 0.0
        %268 = vmatprep.subr.mxu0 0.0
        %269 = vmatpush1.msra.mxu0 0.0
        %270 = vmatprep.subr.mxu0 0.0
        %271 = vmatpush1.msra.mxu0 0.0
        %272 = vmatprep.subr.mxu0 0.0
        %273 = vmatpush1.msra.mxu0 0.0
        %274 = vmatprep.subr.mxu0 0.0
        %275 = vmatpush1.msra.mxu0 0.0
        %276 = vmatprep.subr.mxu0 0.0
        %277 = vmatpush1.msra.mxu0 0.0
        %278 = vmatprep.subr.mxu0 0.0
        %279 = vmatpush1.msra.mxu0 0.0
        %280 = vmatprep.subr.mxu0 0.0
        %281 = vmatpush1.msra.mxu0 0.0
        %282 = vmatprep.subr.mxu0 0.0
        %283 = vmatpush1.msra.mxu0 0.0
        %284 = vmatprep.subr.mxu0 0.0
        %285 = vmatpush1.msra.mxu0 %v252
        %286 = vmatprep.subr.mxu0 0.0
        %287 = vmatpush2.msra.mxu0 0.0
        %288 = vmatprep.subr.mxu0 0.0
        %289 = vmatpush2.msra.mxu0 0.0
        %290 = vmatprep.subr.mxu0 0.0
        %291 = vmatpush2.msra.mxu0 0.0
        %292 = vmatprep.subr.mxu0 0.0
        %293 = vmatpush2.msra.mxu0 0.0
        %294 = vmatprep.subr.mxu0 0.0
        %295 = vmatpush2.msra.mxu0 0.0
        %296 = vmatprep.subr.mxu0 0.0
        %297 = vmatpush2.msra.mxu0 0.0
        %298 = vmatprep.subr.mxu0 0.0
        %299 = vmatpush2.msra.mxu0 0.0
        %300 = vmatprep.subr.mxu0 0.0
        %301 = vmatpush2.msra.mxu0 0.0
        %302 = vmatprep.subr.mxu0 0.0
        %303 = vmatpush2.msra.mxu0 0.0
        %304 = vmatprep.subr.mxu0 0.0
        %305 = vmatpush2.msra.mxu0 0.0
        %306 = vmatprep.subr.mxu0 0.0
        %307 = vmatpush2.msra.mxu0 0.0
        %308 = vmatprep.subr.mxu0 0.0
        %309 = vmatpush2.msra.mxu0 0.0
        %310 = vmatprep.subr.mxu0 0.0
        %311 = vmatpush2.msra.mxu0 0.0
        %312 = vmatprep.subr.mxu0 0.0
        %313 = vmatpush2.msra.mxu0 0.0
        %314 = vmatprep.subr.mxu0 0.0
        %315 = vmatpush2.msra.mxu0 0.0
        %316 = vmatprep.subr.mxu0 0.0
        %317 = vmatpush2.msra.mxu0 0.0
        %318 = vmatprep.mubr.f32.mxu0 0.0
        %319 = vmatmul.mubr.f32.gmra.mxu0 %v249
        %v320 = vpop.f32.mrf.mxu0
        %v321 = vadd.f32 0.0, %v320
        %v322 = vpop.f32.mrf.mxu0
        %323 = vdwg.mxu0
        %324 = vst [vmem:[%s210] sm:$0x3] %v321
        %s325 = scalar_lea.vmem %s2, 2
        %v326 = vld [vmem:[%s325] sm:$0x3]
        %v328 = vsel %vm247, %v326, 0
        %330 = vmatprep.subr.mxu0 0.0
        %331 = vmatpush1.msra.mxu0 0.0
        %332 = vmatprep.subr.mxu0 0.0
        %333 = vmatpush1.msra.mxu0 0.0
        %334 = vmatprep.subr.mxu0 0.0
        %335 = vmatpush1.msra.mxu0 0.0
        %336 = vmatprep.subr.mxu0 0.0
        %337 = vmatpush1.msra.mxu0 0.0
        %338 = vmatprep.subr.mxu0 0.0
        %339 = vmatpush1.msra.mxu0 0.0
        %340 = vmatprep.subr.mxu0 0.0
        %341 = vmatpush1.msra.mxu0 0.0
        %342 = vmatprep.subr.mxu0 0.0
        %343 = vmatpush1.msra.mxu0 0.0
        %344 = vmatprep.subr.mxu0 0.0
        %345 = vmatpush1.msra.mxu0 0.0
        %346 = vmatprep.subr.mxu0 0.0
        %347 = vmatpush1.msra.mxu0 0.0
        %348 = vmatprep.subr.mxu0 0.0
        %349 = vmatpush1.msra.mxu0 0.0
        %350 = vmatprep.subr.mxu0 0.0
        %351 = vmatpush1.msra.mxu0 0.0
        %352 = vmatprep.subr.mxu0 0.0
        %353 = vmatpush1.msra.mxu0 0.0
        %354 = vmatprep.subr.mxu0 0.0
        %355 = vmatpush1.msra.mxu0 0.0
        %356 = vmatprep.subr.mxu0 0.0
        %357 = vmatpush1.msra.mxu0 0.0
        %358 = vmatprep.subr.mxu0 0.0
        %359 = vmatpush1.msra.mxu0 0.0
        %360 = vmatprep.subr.mxu0 0.0
        %361 = vmatpush1.msra.mxu0 %v252
        %362 = vmatprep.subr.mxu0 0.0
        %363 = vmatpush2.msra.mxu0 0.0
        %364 = vmatprep.subr.mxu0 0.0
        %365 = vmatpush2.msra.mxu0 0.0
        %366 = vmatprep.subr.mxu0 0.0
        %367 = vmatpush2.msra.mxu0 0.0
        %368 = vmatprep.subr.mxu0 0.0
        %369 = vmatpush2.msra.mxu0 0.0
        %370 = vmatprep.subr.mxu0 0.0
        %371 = vmatpush2.msra.mxu0 0.0
        %372 = vmatprep.subr.mxu0 0.0
        %373 = vmatpush2.msra.mxu0 0.0
        %374 = vmatprep.subr.mxu0 0.0
        %375 = vmatpush2.msra.mxu0 0.0
        %376 = vmatprep.subr.mxu0 0.0
        %377 = vmatpush2.msra.mxu0 0.0
        %378 = vmatprep.subr.mxu0 0.0
        %379 = vmatpush2.msra.mxu0 0.0
        %380 = vmatprep.subr.mxu0 0.0
        %381 = vmatpush2.msra.mxu0 0.0
        %382 = vmatprep.subr.mxu0 0.0
        %383 = vmatpush2.msra.mxu0 0.0
        %384 = vmatprep.subr.mxu0 0.0
        %385 = vmatpush2.msra.mxu0 0.0
        %386 = vmatprep.subr.mxu0 0.0
        %387 = vmatpush2.msra.mxu0 0.0
        %388 = vmatprep.subr.mxu0 0.0
        %389 = vmatpush2.msra.mxu0 0.0
        %390 = vmatprep.subr.mxu0 0.0
        %391 = vmatpush2.msra.mxu0 0.0
        %392 = vmatprep.subr.mxu0 0.0
        %393 = vmatpush2.msra.mxu0 0.0
        %394 = vmatprep.mubr.f32.mxu0 0.0
        %395 = vmatmul.mubr.f32.gmra.mxu0 %v328
        %v396 = vpop.f32.mrf.mxu0
        %v397 = vadd.f32 0.0, %v396
        %v398 = vpop.f32.mrf.mxu0
        %399 = vdwg.mxu0
        %s400 = scalar_lea.vmem %s210, 4 [#allocation2]
        %401 = vst [vmem:[%s400] sm:$0x3] %v397
        %s402 = scalar_lea.vmem %s218, 4
        %v403 = vld [vmem:[%s402] sm:$0x7]
        %s404 = scalar_lea.vmem %s227, 4
        %v405 = vld [vmem:[%s404] sm:$0x7]
        %v407 = vrot.slane %v403, 5
        %408 = vrot.lane.b32.xlu0 %v407, 1
        %v409 = vpop.permute.xlu0 %408
        %v411 = vsel %vm235, %v403, %v409
        %v412 = vsel %vm235, %v405, %v409
        %s413 = scalar_lea.vmem %s2, 4
        %v414 = vld [vmem:[%s413] sm:$0x3]
        %417 = vrot.lane.b32.xlu0 %v411, 127
        %v418 = vpop.permute.xlu0 %417
        %419 = vrot.lane.b32.xlu0 %v412, 127
        %v420 = vpop.permute.xlu0 %419
        %v421 = vsel %vm245, %v418, %v420
        %v423 = vsel %vm247, %v414, 0
        %v425 = vsel %vm251, %v421, 0
        %427 = vmatprep.subr.mxu0 0.0
        %428 = vmatpush1.msra.mxu0 0.0
        %429 = vmatprep.subr.mxu0 0.0
        %430 = vmatpush1.msra.mxu0 0.0
        %431 = vmatprep.subr.mxu0 0.0
        %432 = vmatpush1.msra.mxu0 0.0
        %433 = vmatprep.subr.mxu0 0.0
        %434 = vmatpush1.msra.mxu0 0.0
        %435 = vmatprep.subr.mxu0 0.0
        %436 = vmatpush1.msra.mxu0 0.0
        %437 = vmatprep.subr.mxu0 0.0
        %438 = vmatpush1.msra.mxu0 0.0
        %439 = vmatprep.subr.mxu0 0.0
        %440 = vmatpush1.msra.mxu0 0.0
        %441 = vmatprep.subr.mxu0 0.0
        %442 = vmatpush1.msra.mxu0 0.0
        %443 = vmatprep.subr.mxu0 0.0
        %444 = vmatpush1.msra.mxu0 0.0
        %445 = vmatprep.subr.mxu0 0.0
        %446 = vmatpush1.msra.mxu0 0.0
        %447 = vmatprep.subr.mxu0 0.0
        %448 = vmatpush1.msra.mxu0 0.0
        %449 = vmatprep.subr.mxu0 0.0
        %450 = vmatpush1.msra.mxu0 0.0
        %451 = vmatprep.subr.mxu0 0.0
        %452 = vmatpush1.msra.mxu0 0.0
        %453 = vmatprep.subr.mxu0 0.0
        %454 = vmatpush1.msra.mxu0 0.0
        %455 = vmatprep.subr.mxu0 0.0
        %456 = vmatpush1.msra.mxu0 0.0
        %457 = vmatprep.subr.mxu0 0.0
        %458 = vmatpush1.msra.mxu0 %v425
        %459 = vmatprep.subr.mxu0 0.0
        %460 = vmatpush2.msra.mxu0 0.0
        %461 = vmatprep.subr.mxu0 0.0
        %462 = vmatpush2.msra.mxu0 0.0
        %463 = vmatprep.subr.mxu0 0.0
        %464 = vmatpush2.msra.mxu0 0.0
        %465 = vmatprep.subr.mxu0 0.0
        %466 = vmatpush2.msra.mxu0 0.0
        %467 = vmatprep.subr.mxu0 0.0
        %468 = vmatpush2.msra.mxu0 0.0
        %469 = vmatprep.subr.mxu0 0.0
        %470 = vmatpush2.msra.mxu0 0.0
        %471 = vmatprep.subr.mxu0 0.0
        %472 = vmatpush2.msra.mxu0 0.0
        %473 = vmatprep.subr.mxu0 0.0
        %474 = vmatpush2.msra.mxu0 0.0
        %475 = vmatprep.subr.mxu0 0.0
        %476 = vmatpush2.msra.mxu0 0.0
        %477 = vmatprep.subr.mxu0 0.0
        %478 = vmatpush2.msra.mxu0 0.0
        %479 = vmatprep.subr.mxu0 0.0
        %480 = vmatpush2.msra.mxu0 0.0
        %481 = vmatprep.subr.mxu0 0.0
        %482 = vmatpush2.msra.mxu0 0.0
        %483 = vmatprep.subr.mxu0 0.0
        %484 = vmatpush2.msra.mxu0 0.0
        %485 = vmatprep.subr.mxu0 0.0
        %486 = vmatpush2.msra.mxu0 0.0
        %487 = vmatprep.subr.mxu0 0.0
        %488 = vmatpush2.msra.mxu0 0.0
        %489 = vmatprep.subr.mxu0 0.0
        %490 = vmatpush2.msra.mxu0 0.0
        %491 = vmatprep.mubr.f32.mxu0 0.0
        %492 = vmatmul.mubr.f32.gmra.mxu0 %v423
        %v493 = vpop.f32.mrf.mxu0
        %v494 = vadd.f32 0.0, %v493
        %v495 = vpop.f32.mrf.mxu0
        %496 = vdwg.mxu0
        %s497 = scalar_lea.vmem %s210, 2 [#allocation2]
        %498 = vst [vmem:[%s497] sm:$0x3] %v494
        %s499 = scalar_lea.vmem %s2, 6
        %v500 = vld [vmem:[%s499] sm:$0x3]
        %v502 = vsel %vm247, %v500, 0
        %504 = vmatprep.subr.mxu0 0.0
        %505 = vmatpush1.msra.mxu0 0.0
        %506 = vmatprep.subr.mxu0 0.0
        %507 = vmatpush1.msra.mxu0 0.0
        %508 = vmatprep.subr.mxu0 0.0
        %509 = vmatpush1.msra.mxu0 0.0
        %510 = vmatprep.subr.mxu0 0.0
        %511 = vmatpush1.msra.mxu0 0.0
        %512 = vmatprep.subr.mxu0 0.0
        %513 = vmatpush1.msra.mxu0 0.0
        %514 = vmatprep.subr.mxu0 0.0
        %515 = vmatpush1.msra.mxu0 0.0
        %516 = vmatprep.subr.mxu0 0.0
        %517 = vmatpush1.msra.mxu0 0.0
        %518 = vmatprep.subr.mxu0 0.0
        %519 = vmatpush1.msra.mxu0 0.0
        %520 = vmatprep.subr.mxu0 0.0
        %521 = vmatpush1.msra.mxu0 0.0
        %522 = vmatprep.subr.mxu0 0.0
        %523 = vmatpush1.msra.mxu0 0.0
        %524 = vmatprep.subr.mxu0 0.0
        %525 = vmatpush1.msra.mxu0 0.0
        %526 = vmatprep.subr.mxu0 0.0
        %527 = vmatpush1.msra.mxu0 0.0
        %528 = vmatprep.subr.mxu0 0.0
        %529 = vmatpush1.msra.mxu0 0.0
        %530 = vmatprep.subr.mxu0 0.0
        %531 = vmatpush1.msra.mxu0 0.0
        %532 = vmatprep.subr.mxu0 0.0
        %533 = vmatpush1.msra.mxu0 0.0
        %534 = vmatprep.subr.mxu0 0.0
        %535 = vmatpush1.msra.mxu0 %v425
        %536 = vmatprep.subr.mxu0 0.0
        %537 = vmatpush2.msra.mxu0 0.0
        %538 = vmatprep.subr.mxu0 0.0
        %539 = vmatpush2.msra.mxu0 0.0
        %540 = vmatprep.subr.mxu0 0.0
        %541 = vmatpush2.msra.mxu0 0.0
        %542 = vmatprep.subr.mxu0 0.0
        %543 = vmatpush2.msra.mxu0 0.0
        %544 = vmatprep.subr.mxu0 0.0
        %545 = vmatpush2.msra.mxu0 0.0
        %546 = vmatprep.subr.mxu0 0.0
        %547 = vmatpush2.msra.mxu0 0.0
        %548 = vmatprep.subr.mxu0 0.0
        %549 = vmatpush2.msra.mxu0 0.0
        %550 = vmatprep.subr.mxu0 0.0
        %551 = vmatpush2.msra.mxu0 0.0
        %552 = vmatprep.subr.mxu0 0.0
        %553 = vmatpush2.msra.mxu0 0.0
        %554 = vmatprep.subr.mxu0 0.0
        %555 = vmatpush2.msra.mxu0 0.0
        %556 = vmatprep.subr.mxu0 0.0
        %557 = vmatpush2.msra.mxu0 0.0
        %558 = vmatprep.subr.mxu0 0.0
        %559 = vmatpush2.msra.mxu0 0.0
        %560 = vmatprep.subr.mxu0 0.0
        %561 = vmatpush2.msra.mxu0 0.0
        %562 = vmatprep.subr.mxu0 0.0
        %563 = vmatpush2.msra.mxu0 0.0
        %564 = vmatprep.subr.mxu0 0.0
        %565 = vmatpush2.msra.mxu0 0.0
        %566 = vmatprep.subr.mxu0 0.0
        %567 = vmatpush2.msra.mxu0 0.0
        %568 = vmatprep.mubr.f32.mxu0 0.0
        %569 = vmatmul.mubr.f32.gmra.mxu0 %v502
        %v570 = vpop.f32.mrf.mxu0
        %v571 = vadd.f32 0.0, %v570
        %v572 = vpop.f32.mrf.mxu0
        %573 = vdwg.mxu0
        %s574 = scalar_lea.vmem %s210, 6 [#allocation2]
        %575 = vst [vmem:[%s574] sm:$0x3] %v571
        %s576 = sand.u32 %s116, 1
        %s577 = scalar_lea.sflag [#allocation3], %s576
        %s578 = sand.u32 %s116, 1
        %s579 = smul.addr %s578, 8
        %s580 = scalar_lea.vmem [#allocation2], %s579
        // Predicated region
        $region33: #{tpu_custom_call.1} parent=31 // pred_check
          %p581 = pneg %p126
        $region34: #{tpu_custom_call.1} parent=31 // pred_check_branch
          %583 = sbr.rel (%p581) target = $region36
        $region35: #{tpu_custom_call.1} parent=31 // pred_region
          %s585 = ssub.s32 128, 128
          %586 = vsyncadd %s577, %s585
          %s587 = smul.addr %s21, 4
          %s588 = sadd.s32 %s22, %s587
          %s589 = smul.addr %s588, 32
          %s590 = scalar_lea.hbm %s3, %s589
          %s591 = sshll.u32 %s580, 4
          %s592 = int_to_ptr.vmem [resolvable:$true] %s591
          %597 = dma.vmem_to_hbm [thread:$0]  %s592, 128, %s590, %s577, 32, 32, 2
        $region36: #{tpu_custom_call.1} parent=31 // pred_fallthru
          _
      $region32: #{tpu_custom_call.1} parent=5 // pred_fallthru
        _
      %p598 = scmp.le.s32.totalorder 2, %s12
      // Predicated region
      $region37: #{tpu_custom_call.1} parent=5 // pred_check
        %p599 = pneg %p598
      $region38: #{tpu_custom_call.1} parent=5 // pred_check_branch
        %601 = sbr.rel (%p599) target = $region40
      $region39: #{tpu_custom_call.1} parent=5 // pred_region
        %s602 = ssub.s32 %s12, 2
        // Predicated region
        $region41: #{tpu_custom_call.1} parent=39 // pred_check
          %p603 = pneg %p132
        $region42: #{tpu_custom_call.1} parent=39 // pred_check_branch
          %605 = sbr.rel (%p603) target = $region44
        $region43: #{tpu_custom_call.1} parent=39 // pred_region
          %s606 = sand.u32 %s117, 1
          %s607 = scalar_lea.sflag [#allocation3], %s606
          %s608 = sand.u32 %s117, 1
          %s609 = smul.addr %s608, 8
          %s610 = scalar_lea.vmem [#allocation2], %s609
          %611 = dma.done %s607, 128
        $region44: #{tpu_custom_call.1} parent=39 // pred_fallthru
          _
      $region40: #{tpu_custom_call.1} parent=5 // pred_fallthru
        _
    $region6: #{tpu_custom_call.1} parent=1 // loop_footer
      %s16 = sadd.s32 1, %s12
    $region7: #{tpu_custom_call.1} parent=1 // loop_footer_branch
      %11 = sbr.rel target = $region3
    $region8: #{tpu_custom_call.1} parent=1 // loop_exit
      _
    %612 = vsyncpa [#allocation3], 1
    %s613 = scalar_lea.sflag [#allocation3], 1
    %614 = vsyncpa %s613, 1

</llo_original>
